<compile_context>
chip_gen: v6e
topology: v6e:2x2x1
jax: 0.10.0
libtpu: 0.0.40
codegen_flags: <defaults>
</compile_context>

<pallas_src>
import math

import jax
import jax.numpy as jnp
from jax.experimental import pallas as pl
from jax.experimental.pallas import tpu as pltpu

LN_EPS = 1e-5  # matches torch.nn.LayerNorm default


def _round_up(x, m):
    return (x + m - 1) // m * m


def supervised_head_kernel(x_ref, w1_ref, b1_ref, gamma_ref, beta_ref,
                           w2_ref, b2_ref, o_ref):
    # x tile: (tm, d_in), native dtype; MXU accumulates in f32.
    x = x_ref[...]
    h = jnp.dot(x, w1_ref[...], preferred_element_type=jnp.float32)
    h = h + b1_ref[...]                              # b1 is f32 -> h stays f32

    # LayerNorm over last dim (biased variance, like torch); fused one-pass stats.
    inv_d = jnp.float32(1.0 / h.shape[-1])
    m1 = jnp.sum(h, axis=-1, keepdims=True) * inv_d
    m2 = jnp.sum(h * h, axis=-1, keepdims=True) * inv_d
    var = jnp.maximum(m2 - m1 * m1, 0.0)
    h = (h - m1) * jax.lax.rsqrt(var + LN_EPS)
    h = h * gamma_ref[...] + beta_ref[...]

    # ReLU
    h = jnp.maximum(h, 0.0)

    # linear2 (output columns are lane-padded to a multiple of 128 in the wrapper)
    out = jnp.dot(h.astype(w2_ref.dtype), w2_ref[...],
                  preferred_element_type=jnp.float32)
    out = out + b2_ref[...]
    o_ref[...] = out.astype(o_ref.dtype)


def supervised_head(x, w1, b1, gamma, beta, w2, b2, *, tm=256):
    """x: (N, d_in); w1: (d_in, d_in) [in,out]; w2: (d_in, d_out) [in,out]."""
    N, d_in = x.shape
    d_out = w2.shape[1]

    # Row tile: multiple of the sublane packing, no larger than (padded) N.
    row_align = 16 if x.dtype == jnp.bfloat16 else 8
    tm = min(int(tm), _round_up(N, row_align))
    tm = max(row_align, _round_up(tm, row_align))
    n_pad = _round_up(N, tm)

    # Lane-dense output: pad d_out (and W2 / b2) to a multiple of 128.
    d_out_p = _round_up(d_out, 128)

    if n_pad != N:
        x = jnp.pad(x, ((0, n_pad - N), (0, 0)))
    if d_out_p != d_out:
        w2 = jnp.pad(w2, ((0, 0), (0, d_out_p - d_out)))
        b2 = jnp.pad(b2, (0, d_out_p - d_out))

    b1_2d = b1.reshape(1, d_in).astype(jnp.float32)
    g_2d = gamma.reshape(1, d_in).astype(jnp.float32)
    beta_2d = beta.reshape(1, d_in).astype(jnp.float32)
    b2_2d = b2.reshape(1, d_out_p).astype(jnp.float32)

    grid = (n_pad // tm,)

    def nbytes(shape, dtype):
        return math.prod(shape) * jnp.dtype(dtype).itemsize

    def build_and_run(single_buffer_weights):
        wmode = {"pipeline_mode": pl.Buffered(1)} if single_buffer_weights else {}
        in_specs = [
            pl.BlockSpec((tm, d_in), lambda i: (i, 0)),                # x rows
            pl.BlockSpec((d_in, d_in), lambda i: (0, 0), **wmode),     # W1
            pl.BlockSpec((1, d_in), lambda i: (0, 0), **wmode),        # b1
            pl.BlockSpec((1, d_in), lambda i: (0, 0), **wmode),        # gamma
            pl.BlockSpec((1, d_in), lambda i: (0, 0), **wmode),        # beta
            pl.BlockSpec((d_in, d_out_p), lambda i: (0, 0), **wmode),  # W2
            pl.BlockSpec((1, d_out_p), lambda i: (0, 0), **wmode),     # b2
        ]
        out_specs = pl.BlockSpec((tm, d_out_p), lambda i: (i, 0))

        weight_bufs = 1 if single_buffer_weights else 2
        weight_bytes = (nbytes((d_in, d_in), w1.dtype)
                        + nbytes((d_in, d_out_p), w2.dtype)
                        + 4 * nbytes((1, max(d_in, d_out_p)), jnp.float32))
        io_bytes = 2 * (nbytes((tm, d_in), x.dtype)
                        + nbytes((tm, d_out_p), x.dtype))
        vmem_limit = min(max(2 * (weight_bufs * weight_bytes + io_bytes),
                             16 << 20), 64 << 20)

        return pl.pallas_call(
            supervised_head_kernel,
            out_shape=jax.ShapeDtypeStruct((n_pad, d_out_p), x.dtype),
            grid_spec=pltpu.PrefetchScalarGridSpec(
                num_scalar_prefetch=0,
                grid=grid,
                in_specs=in_specs,
                out_specs=out_specs,
            ),
            compiler_params=pltpu.CompilerParams(
                dimension_semantics=("parallel",),
                vmem_limit_bytes=int(vmem_limit)),
        )(x, w1, b1_2d, g_2d, beta_2d, w2, b2_2d)

    try:
        out_p = build_and_run(True)
    except Exception:
        # Fallback if this jax version rejects pipeline_mode=pl.Buffered(1).
        out_p = build_and_run(False)

    return out_p[:N, :d_out]


def reference(x, w1, b1, gamma, beta, w2, b2):
    h = x @ w1 + b1
    mean = h.mean(-1, keepdims=True)
    var = ((h - mean) ** 2).mean(-1, keepdims=True)
    h = (h - mean) / jnp.sqrt(var + LN_EPS)
    h = h * gamma + beta
    h = jnp.maximum(h, 0.0)
    return h @ w2 + b2


if __name__ == "__main__":
    d_in, d_out = 32, 16
    N = 20  # deliberately ragged: exercises row padding + lane padding of d_out

    key = jax.random.PRNGKey(0)
    kx, k1, kb1, k2, kb2 = jax.random.split(key, 5)

    x = jax.random.normal(kx, (N, d_in), dtype=jnp.float32)

    # PyTorch nn.Linear stores weight as (out, in); we build (in, out) directly
    # with a torch-like uniform bound (deterministic synthetic init).
    bound1 = 1.0 / math.sqrt(d_in)
    w1 = jax.random.uniform(k1, (d_in, d_in), minval=-bound1, maxval=bound1)
    b1 = jax.random.uniform(kb1, (d_in,), minval=-bound1, maxval=bound1)
    w2 = jax.random.uniform(k2, (d_in, d_out), minval=-bound1, maxval=bound1)
    b2 = jax.random.uniform(kb2, (d_out,), minval=-bound1, maxval=bound1)

    gamma = jnp.ones((d_in,), jnp.float32)   # LayerNorm default affine init
    beta = jnp.zeros((d_in,), jnp.float32)

    out = supervised_head(x, w1, b1, gamma, beta, w2, b2)
    out = jax.block_until_ready(out)

    ref = reference(x, w1, b1, gamma, beta, w2, b2)
    assert out.shape == (N, d_out)
    assert jnp.allclose(out, ref, atol=1e-4, rtol=1e-4), "mismatch vs reference"

    print("KERNEL_OK")
</pallas_src>

<mosaic_0001>
module attributes {stable_mosaic.version = 11 : i64} {
  func.func @supervised_head_kernel(%arg0: i32, %arg1: memref<24x32xf32, #tpu.memory_space<vmem>>, %arg2: memref<32x32xf32, #tpu.memory_space<vmem>>, %arg3: memref<1x32xf32, #tpu.memory_space<vmem>>, %arg4: memref<1x32xf32, #tpu.memory_space<vmem>>, %arg5: memref<1x32xf32, #tpu.memory_space<vmem>>, %arg6: memref<32x128xf32, #tpu.memory_space<vmem>>, %arg7: memref<1x128xf32, #tpu.memory_space<vmem>>, %arg8: memref<24x128xf32, #tpu.memory_space<vmem>>) attributes {dimension_semantics = [#tpu.dimension_semantics<parallel>], iteration_bounds = array<i64: 1>, scalar_prefetch = 0 : i64, scratch_operands = 0 : i64, tpu.core_type = #tpu.core_type<tc>, window_params = [{transform_indices = @transform_0, window_bounds = array<i64: 24, 32>}, {pipeline_mode = #tpu.pipeline_mode<synchronous>, transform_indices = @transform_1, window_bounds = array<i64: 32, 32>}, {pipeline_mode = #tpu.pipeline_mode<synchronous>, transform_indices = @transform_2, window_bounds = array<i64: 1, 32>}, {pipeline_mode = #tpu.pipeline_mode<synchronous>, transform_indices = @transform_3, window_bounds = array<i64: 1, 32>}, {pipeline_mode = #tpu.pipeline_mode<synchronous>, transform_indices = @transform_4, window_bounds = array<i64: 1, 32>}, {pipeline_mode = #tpu.pipeline_mode<synchronous>, transform_indices = @transform_5, window_bounds = array<i64: 32, 128>}, {pipeline_mode = #tpu.pipeline_mode<synchronous>, transform_indices = @transform_6, window_bounds = array<i64: 1, 128>}, {transform_indices = @transform_7, window_bounds = array<i64: 24, 128>}]} {
    %c0 = arith.constant 0 : index
    %c0_0 = arith.constant 0 : index
    %0 = vector.load %arg1[%c0, %c0_0] : memref<24x32xf32, #tpu.memory_space<vmem>>, vector<24x32xf32>
    %c0_1 = arith.constant 0 : index
    %c0_2 = arith.constant 0 : index
    %1 = vector.load %arg2[%c0_1, %c0_2] : memref<32x32xf32, #tpu.memory_space<vmem>>, vector<32x32xf32>
    %cst = arith.constant dense<0.000000e+00> : vector<24x32xf32>
    %2 = tpu.matmul %0, %1, %cst {dimension_numbers = #tpu.dot_dimension_numbers<[1], [0], [0], [1], [0, 0, 1, 1], [], []>} : vector<24x32xf32>, vector<32x32xf32>, vector<24x32xf32> -> vector<24x32xf32>
    %c0_3 = arith.constant 0 : index
    %c0_4 = arith.constant 0 : index
    %3 = vector.load %arg3[%c0_3, %c0_4] : memref<1x32xf32, #tpu.memory_space<vmem>>, vector<1x32xf32>
    %4 = vector.broadcast %3 : vector<1x32xf32> to vector<24x32xf32>
    %5 = arith.addf %2, %4 : vector<24x32xf32>
    %cst_5 = arith.constant dense<0.000000e+00> : vector<24xf32>
    %6 = vector.multi_reduction <add>, %5, %cst_5 [1] : vector<24x32xf32> to vector<24xf32>
    %7 = vector.shape_cast %6 : vector<24xf32> to vector<24x1xf32>
    %cst_6 = arith.constant 3.125000e-02 : f32
    %8 = vector.broadcast %cst_6 : f32 to vector<24x1xf32>
    %9 = arith.mulf %7, %8 : vector<24x1xf32>
    %10 = arith.mulf %5, %5 : vector<24x32xf32>
    %cst_7 = arith.constant dense<0.000000e+00> : vector<24xf32>
    %11 = vector.multi_reduction <add>, %10, %cst_7 [1] : vector<24x32xf32> to vector<24xf32>
    %12 = vector.shape_cast %11 : vector<24xf32> to vector<24x1xf32>
    %cst_8 = arith.constant 3.125000e-02 : f32
    %13 = vector.broadcast %cst_8 : f32 to vector<24x1xf32>
    %14 = arith.mulf %12, %13 : vector<24x1xf32>
    %15 = arith.mulf %9, %9 : vector<24x1xf32>
    %16 = arith.subf %14, %15 : vector<24x1xf32>
    %cst_9 = arith.constant 0.000000e+00 : f32
    %17 = vector.broadcast %cst_9 : f32 to vector<24x1xf32>
    %18 = arith.maximumf %16, %17 : vector<24x1xf32>
    %19 = vector.broadcast %9 : vector<24x1xf32> to vector<24x32xf32>
    %20 = arith.subf %5, %19 : vector<24x32xf32>
    %cst_10 = arith.constant 9.99999974E-6 : f32
    %21 = vector.broadcast %cst_10 : f32 to vector<24x1xf32>
    %22 = arith.addf %18, %21 : vector<24x1xf32>
    %23 = math.rsqrt %22 : vector<24x1xf32>
    %24 = vector.broadcast %23 : vector<24x1xf32> to vector<24x32xf32>
    %25 = arith.mulf %20, %24 : vector<24x32xf32>
    %c0_11 = arith.constant 0 : index
    %c0_12 = arith.constant 0 : index
    %26 = vector.load %arg4[%c0_11, %c0_12] : memref<1x32xf32, #tpu.memory_space<vmem>>, vector<1x32xf32>
    %27 = vector.broadcast %26 : vector<1x32xf32> to vector<24x32xf32>
    %28 = arith.mulf %25, %27 : vector<24x32xf32>
    %c0_13 = arith.constant 0 : index
    %c0_14 = arith.constant 0 : index
    %29 = vector.load %arg5[%c0_13, %c0_14] : memref<1x32xf32, #tpu.memory_space<vmem>>, vector<1x32xf32>
    %30 = vector.broadcast %29 : vector<1x32xf32> to vector<24x32xf32>
    %31 = arith.addf %28, %30 : vector<24x32xf32>
    %cst_15 = arith.constant 0.000000e+00 : f32
    %32 = vector.broadcast %cst_15 : f32 to vector<24x32xf32>
    %33 = arith.maximumf %31, %32 : vector<24x32xf32>
    %c0_16 = arith.constant 0 : index
    %c0_17 = arith.constant 0 : index
    %34 = vector.load %arg6[%c0_16, %c0_17] : memref<32x128xf32, #tpu.memory_space<vmem>>, vector<32x128xf32>
    %cst_18 = arith.constant dense<0.000000e+00> : vector<24x128xf32>
    %35 = tpu.matmul %33, %34, %cst_18 {dimension_numbers = #tpu.dot_dimension_numbers<[1], [0], [0], [1], [0, 0, 1, 1], [], []>} : vector<24x32xf32>, vector<32x128xf32>, vector<24x128xf32> -> vector<24x128xf32>
    %c0_19 = arith.constant 0 : index
    %c0_20 = arith.constant 0 : index
    %36 = vector.load %arg7[%c0_19, %c0_20] : memref<1x128xf32, #tpu.memory_space<vmem>>, vector<1x128xf32>
    %37 = vector.broadcast %36 : vector<1x128xf32> to vector<24x128xf32>
    %38 = arith.addf %35, %37 : vector<24x128xf32>
    %c0_21 = arith.constant 0 : index
    %c0_22 = arith.constant 0 : index
    %39 = vector.load %arg8[%c0_21, %c0_22] : memref<24x128xf32, #tpu.memory_space<vmem>>, vector<24x128xf32>
    tpu.vector_store %arg8[%c0_21, %c0_22], %38 {strides = array<i32>} : memref<24x128xf32, #tpu.memory_space<vmem>>, vector<24x128xf32>,
    return
  }
  func.func @transform_0(%arg0: i32) -> (i32, i32) {
    %c0_i32 = arith.constant 0 : i32
    %c0_i32_0 = arith.constant 0 : i32
    return %arg0, %c0_i32 : i32, i32
  }
  func.func @transform_1(%arg0: i32) -> (i32, i32) {
    %c0_i32 = arith.constant 0 : i32
    %c0_i32_0 = arith.constant 0 : i32
    %c0_i32_1 = arith.constant 0 : i32
    return %c0_i32, %c0_i32_0 : i32, i32
  }
  func.func @transform_2(%arg0: i32) -> (i32, i32) {
    %c0_i32 = arith.constant 0 : i32
    %c0_i32_0 = arith.constant 0 : i32
    %c0_i32_1 = arith.constant 0 : i32
    return %c0_i32, %c0_i32_0 : i32, i32
  }
  func.func @transform_3(%arg0: i32) -> (i32, i32) {
    %c0_i32 = arith.constant 0 : i32
    %c0_i32_0 = arith.constant 0 : i32
    %c0_i32_1 = arith.constant 0 : i32
    return %c0_i32, %c0_i32_0 : i32, i32
  }
  func.func @transform_4(%arg0: i32) -> (i32, i32) {
    %c0_i32 = arith.constant 0 : i32
    %c0_i32_0 = arith.constant 0 : i32
    %c0_i32_1 = arith.constant 0 : i32
    return %c0_i32, %c0_i32_0 : i32, i32
  }
  func.func @transform_5(%arg0: i32) -> (i32, i32) {
    %c0_i32 = arith.constant 0 : i32
    %c0_i32_0 = arith.constant 0 : i32
    %c0_i32_1 = arith.constant 0 : i32
    return %c0_i32, %c0_i32_0 : i32, i32
  }
  func.func @transform_6(%arg0: i32) -> (i32, i32) {
    %c0_i32 = arith.constant 0 : i32
    %c0_i32_0 = arith.constant 0 : i32
    %c0_i32_1 = arith.constant 0 : i32
    return %c0_i32, %c0_i32_0 : i32, i32
  }
  func.func @transform_7(%arg0: i32) -> (i32, i32) {
    %c0_i32 = arith.constant 0 : i32
    %c0_i32_0 = arith.constant 0 : i32
    return %arg0, %c0_i32 : i32, i32
  }
}

module attributes {stable_mosaic.version = 11 : i64} {
  func.func @supervised_head_kernel(%arg0: i32, %arg1: memref<24x32xf32, #tpu.memory_space<vmem>>, %arg2: memref<32x32xf32, #tpu.memory_space<vmem>>, %arg3: memref<1x32xf32, #tpu.memory_space<vmem>>, %arg4: memref<1x32xf32, #tpu.memory_space<vmem>>, %arg5: memref<1x32xf32, #tpu.memory_space<vmem>>, %arg6: memref<32x128xf32, #tpu.memory_space<vmem>>, %arg7: memref<1x128xf32, #tpu.memory_space<vmem>>, %arg8: memref<24x128xf32, #tpu.memory_space<vmem>>) attributes {dimension_semantics = [#tpu.dimension_semantics<parallel>], iteration_bounds = array<i64: 1>, scalar_prefetch = 0 : i64, scratch_operands = 0 : i64, tpu.core_type = #tpu.core_type<tc>, window_params = [{transform_indices = @transform_0, window_bounds = array<i64: 24, 32>}, {pipeline_mode = #tpu.pipeline_mode<synchronous>, transform_indices = @transform_1, window_bounds = array<i64: 32, 32>}, {pipeline_mode = #tpu.pipeline_mode<synchronous>, transform_indices = @transform_2, window_bounds = array<i64: 1, 32>}, {pipeline_mode = #tpu.pipeline_mode<synchronous>, transform_indices = @transform_3, window_bounds = array<i64: 1, 32>}, {pipeline_mode = #tpu.pipeline_mode<synchronous>, transform_indices = @transform_4, window_bounds = array<i64: 1, 32>}, {pipeline_mode = #tpu.pipeline_mode<synchronous>, transform_indices = @transform_5, window_bounds = array<i64: 32, 128>}, {pipeline_mode = #tpu.pipeline_mode<synchronous>, transform_indices = @transform_6, window_bounds = array<i64: 1, 128>}, {transform_indices = @transform_7, window_bounds = array<i64: 24, 128>}]} {
    %c0 = arith.constant 0 : index
    %c0_0 = arith.constant 0 : index
    %0 = vector.load %arg1[%c0, %c0_0] : memref<24x32xf32, #tpu.memory_space<vmem>>, vector<24x32xf32>
    %c0_1 = arith.constant 0 : index
    %c0_2 = arith.constant 0 : index
    %1 = vector.load %arg2[%c0_1, %c0_2] : memref<32x32xf32, #tpu.memory_space<vmem>>, vector<32x32xf32>
    %cst = arith.constant dense<0.000000e+00> : vector<24x32xf32>
    %2 = tpu.matmul %0, %1, %cst {dimension_numbers = #tpu.dot_dimension_numbers<[1], [0], [0], [1], [0, 0, 1, 1], [], []>} : vector<24x32xf32>, vector<32x32xf32>, vector<24x32xf32> -> vector<24x32xf32>
    %c0_3 = arith.constant 0 : index
    %c0_4 = arith.constant 0 : index
    %3 = vector.load %arg3[%c0_3, %c0_4] : memref<1x32xf32, #tpu.memory_space<vmem>>, vector<1x32xf32>
    %4 = vector.broadcast %3 : vector<1x32xf32> to vector<24x32xf32>
    %5 = arith.addf %2, %4 : vector<24x32xf32>
    %cst_5 = arith.constant dense<0.000000e+00> : vector<24xf32>
    %6 = vector.multi_reduction <add>, %5, %cst_5 [1] : vector<24x32xf32> to vector<24xf32>
    %7 = vector.shape_cast %6 : vector<24xf32> to vector<24x1xf32>
    %cst_6 = arith.constant 3.125000e-02 : f32
    %8 = vector.broadcast %cst_6 : f32 to vector<24x1xf32>
    %9 = arith.mulf %7, %8 : vector<24x1xf32>
    %10 = arith.mulf %5, %5 : vector<24x32xf32>
    %cst_7 = arith.constant dense<0.000000e+00> : vector<24xf32>
    %11 = vector.multi_reduction <add>, %10, %cst_7 [1] : vector<24x32xf32> to vector<24xf32>
    %12 = vector.shape_cast %11 : vector<24xf32> to vector<24x1xf32>
    %cst_8 = arith.constant 3.125000e-02 : f32
    %13 = vector.broadcast %cst_8 : f32 to vector<24x1xf32>
    %14 = arith.mulf %12, %13 : vector<24x1xf32>
    %15 = arith.mulf %9, %9 : vector<24x1xf32>
    %16 = arith.subf %14, %15 : vector<24x1xf32>
    %cst_9 = arith.constant 0.000000e+00 : f32
    %17 = vector.broadcast %cst_9 : f32 to vector<24x1xf32>
    %18 = arith.maximumf %16, %17 : vector<24x1xf32>
    %19 = vector.broadcast %9 : vector<24x1xf32> to vector<24x32xf32>
    %20 = arith.subf %5, %19 : vector<24x32xf32>
    %cst_10 = arith.constant 9.99999974E-6 : f32
    %21 = vector.broadcast %cst_10 : f32 to vector<24x1xf32>
    %22 = arith.addf %18, %21 : vector<24x1xf32>
    %23 = math.rsqrt %22 : vector<24x1xf32>
    %24 = vector.broadcast %23 : vector<24x1xf32> to vector<24x32xf32>
    %25 = arith.mulf %20, %24 : vector<24x32xf32>
    %c0_11 = arith.constant 0 : index
    %c0_12 = arith.constant 0 : index
    %26 = vector.load %arg4[%c0_11, %c0_12] : memref<1x32xf32, #tpu.memory_space<vmem>>, vector<1x32xf32>
    %27 = vector.broadcast %26 : vector<1x32xf32> to vector<24x32xf32>
    %28 = arith.mulf %25, %27 : vector<24x32xf32>
    %c0_13 = arith.constant 0 : index
    %c0_14 = arith.constant 0 : index
    %29 = vector.load %arg5[%c0_13, %c0_14] : memref<1x32xf32, #tpu.memory_space<vmem>>, vector<1x32xf32>
    %30 = vector.broadcast %29 : vector<1x32xf32> to vector<24x32xf32>
    %31 = arith.addf %28, %30 : vector<24x32xf32>
    %cst_15 = arith.constant 0.000000e+00 : f32
    %32 = vector.broadcast %cst_15 : f32 to vector<24x32xf32>
    %33 = arith.maximumf %31, %32 : vector<24x32xf32>
    %c0_16 = arith.constant 0 : index
    %c0_17 = arith.constant 0 : index
    %34 = vector.load %arg6[%c0_16, %c0_17] : memref<32x128xf32, #tpu.memory_space<vmem>>, vector<32x128xf32>
    %cst_18 = arith.constant dense<0.000000e+00> : vector<24x128xf32>
    %35 = tpu.matmul %33, %34, %cst_18 {dimension_numbers = #tpu.dot_dimension_numbers<[1], [0], [0], [1], [0, 0, 1, 1], [], []>} : vector<24x32xf32>, vector<32x128xf32>, vector<24x128xf32> -> vector<24x128xf32>
    %c0_19 = arith.constant 0 : index
    %c0_20 = arith.constant 0 : index
    %36 = vector.load %arg7[%c0_19, %c0_20] : memref<1x128xf32, #tpu.memory_space<vmem>>, vector<1x128xf32>
    %37 = vector.broadcast %36 : vector<1x128xf32> to vector<24x128xf32>
    %38 = arith.addf %35, %37 : vector<24x128xf32>
    %c0_21 = arith.constant 0 : index
    %c0_22 = arith.constant 0 : index
    %39 = vector.load %arg8[%c0_21, %c0_22] : memref<24x128xf32, #tpu.memory_space<vmem>>, vector<24x128xf32>
    tpu.vector_store %arg8[%c0_21, %c0_22], %38 {strides = array<i32>} : memref<24x128xf32, #tpu.memory_space<vmem>>, vector<24x128xf32>,
    return
  }
  func.func @transform_0(%arg0: i32) -> (i32, i32) {
    %c0_i32 = arith.constant 0 : i32
    %c0_i32_0 = arith.constant 0 : i32
    return %arg0, %c0_i32 : i32, i32
  }
  func.func @transform_1(%arg0: i32) -> (i32, i32) {
    %c0_i32 = arith.constant 0 : i32
    %c0_i32_0 = arith.constant 0 : i32
    %c0_i32_1 = arith.constant 0 : i32
    return %c0_i32, %c0_i32_0 : i32, i32
  }
  func.func @transform_2(%arg0: i32) -> (i32, i32) {
    %c0_i32 = arith.constant 0 : i32
    %c0_i32_0 = arith.constant 0 : i32
    %c0_i32_1 = arith.constant 0 : i32
    return %c0_i32, %c0_i32_0 : i32, i32
  }
  func.func @transform_3(%arg0: i32) -> (i32, i32) {
    %c0_i32 = arith.constant 0 : i32
    %c0_i32_0 = arith.constant 0 : i32
    %c0_i32_1 = arith.constant 0 : i32
    return %c0_i32, %c0_i32_0 : i32, i32
  }
  func.func @transform_4(%arg0: i32) -> (i32, i32) {
    %c0_i32 = arith.constant 0 : i32
    %c0_i32_0 = arith.constant 0 : i32
    %c0_i32_1 = arith.constant 0 : i32
    return %c0_i32, %c0_i32_0 : i32, i32
  }
  func.func @transform_5(%arg0: i32) -> (i32, i32) {
    %c0_i32 = arith.constant 0 : i32
    %c0_i32_0 = arith.constant 0 : i32
    %c0_i32_1 = arith.constant 0 : i32
    return %c0_i32, %c0_i32_0 : i32, i32
  }
  func.func @transform_6(%arg0: i32) -> (i32, i32) {
    %c0_i32 = arith.constant 0 : i32
    %c0_i32_0 = arith.constant 0 : i32
    %c0_i32_1 = arith.constant 0 : i32
    return %c0_i32, %c0_i32_0 : i32, i32
  }
  func.func @transform_7(%arg0: i32) -> (i32, i32) {
    %c0_i32 = arith.constant 0 : i32
    %c0_i32_0 = arith.constant 0 : i32
    return %arg0, %c0_i32 : i32, i32
  }
}

</mosaic_0001>

<llo_original>
// kernel: tpu_custom_call.1
$region0: #{tpu_custom_call.1}
  #allocation0 [shape = 'u32[]', space=smem, size = 0x4, offset = 0x4, fixed_abs, tag = 'smem constant byte address 0x4 - core index']
  #allocation1 [shape = 'u32[144,128]{1,0:T(1,128)}', space=vmem, size = 0x12000, scoped, tag = 'internal scratch']
  %s0 = inlined_call_operand.hbm [shape: f32[24,32], index: 0, kind: input, shape index: {}]
  %s1 = inlined_call_operand.hbm [shape: f32[32,32], index: 1, kind: input, shape index: {}]
  %s2 = inlined_call_operand.vmem [shape: f32[1,32], index: 2, kind: input, shape index: {}]
  %s3 = inlined_call_operand.vmem [shape: f32[1,32], index: 3, kind: input, shape index: {}]
  %s4 = inlined_call_operand.vmem [shape: f32[1,32], index: 4, kind: input, shape index: {}]
  %s5 = inlined_call_operand.hbm [shape: f32[32,128], index: 5, kind: input, shape index: {}]
  %s6 = inlined_call_operand.vmem [shape: f32[1,128], index: 6, kind: input, shape index: {}]
  %s7 = inlined_call_operand.hbm [shape: f32[24,128], index: 7, kind: output, shape index: {}]
  %s8 = sld [smem:[#allocation0]]
  $region50: #{tpu_custom_call.1} parent=0
    _
  %s10 = ssub.s32 1, %s8
  %s11 = scalar_select 0, %s10, %s8
  $region1: #{tpu_custom_call.1} parent=0
    #allocation2 [shape = 'u8[12288]{0}', space=vmem, size = 0x3000, scoped, tag = 'input window, operand 0, single buffered']
    #allocation3 [shape = 's32[1]{0}', space=sflag, size = 0x4, scoped, tag = 'scoped memory for tpu_custom_call.1']
    #allocation4 [shape = 's32[1]{0}', space=sflag, size = 0x4, scoped, tag = 'scoped memory for tpu_custom_call.1']
    #allocation5 [shape = 'u8[16384]{0}', space=vmem, size = 0x4000, scoped, tag = 'input window, operand 1, single buffered']
    #allocation6 [shape = 's32[1]{0}', space=sflag, size = 0x4, scoped, tag = 'scoped memory for tpu_custom_call.1']
    #allocation7 [shape = 'u8[16384]{0}', space=vmem, size = 0x4000, scoped, tag = 'input window, operand 5, single buffered']
    #allocation8 [shape = 'u8[12288]{0}', space=vmem, size = 0x3000, scoped, tag = 'output window, operand 0, single buffered']
    %12 = vsyncpa [#allocation3], 0
    %13 = vsyncpa [#allocation6], 0
    %14 = vsyncpa [#allocation4], 0
    // Predicated region
    $region2: #{tpu_custom_call.1} parent=1 // pred_check
      _
    $region3: #{tpu_custom_call.1} parent=1 // pred_check_branch
      %16 = sbr.rel (0) target = $region5
    $region4: #{tpu_custom_call.1} parent=1 // pred_region
      %s18 = ssub.s32 384, 384
      %19 = vsyncadd [#allocation3], %s18
      %s20 = sshll.u32 [#allocation2], 4
      %s21 = int_to_ptr.vmem [resolvable:$true] %s20
      %26 = dma.hbm_to_vmem [thread:$0]  %s0, 384, %s21, [#allocation3], 128, 128, 8
    $region5: #{tpu_custom_call.1} parent=1 // pred_fallthru
      _
    // Predicated region
    $region6: #{tpu_custom_call.1} parent=1 // pred_check
      _
    $region7: #{tpu_custom_call.1} parent=1 // pred_check_branch
      %28 = sbr.rel (0) target = $region9
    $region8: #{tpu_custom_call.1} parent=1 // pred_region
      %s30 = ssub.s32 512, 512
      %31 = vsyncadd [#allocation6], %s30
      %s32 = sshll.u32 [#allocation5], 4
      %s33 = int_to_ptr.vmem [resolvable:$true] %s32
      %38 = dma.hbm_to_vmem [thread:$0]  %s1, 512, %s33, [#allocation6], 128, 128, 8
    $region9: #{tpu_custom_call.1} parent=1 // pred_fallthru
      _
    // Predicated region
    $region10: #{tpu_custom_call.1} parent=1 // pred_check
      _
    $region11: #{tpu_custom_call.1} parent=1 // pred_check_branch
      %40 = sbr.rel (0) target = $region13
    $region12: #{tpu_custom_call.1} parent=1 // pred_region
      _
    $region13: #{tpu_custom_call.1} parent=1 // pred_fallthru
      _
    // Predicated region
    $region14: #{tpu_custom_call.1} parent=1 // pred_check
      _
    $region15: #{tpu_custom_call.1} parent=1 // pred_check_branch
      %42 = sbr.rel (0) target = $region17
    $region16: #{tpu_custom_call.1} parent=1 // pred_region
      _
    $region17: #{tpu_custom_call.1} parent=1 // pred_fallthru
      _
    // Predicated region
    $region18: #{tpu_custom_call.1} parent=1 // pred_check
      _
    $region19: #{tpu_custom_call.1} parent=1 // pred_check_branch
      %44 = sbr.rel (0) target = $region21
    $region20: #{tpu_custom_call.1} parent=1 // pred_region
      _
    $region21: #{tpu_custom_call.1} parent=1 // pred_fallthru
      _
    // Predicated region
    $region22: #{tpu_custom_call.1} parent=1 // pred_check
      _
    $region23: #{tpu_custom_call.1} parent=1 // pred_check_branch
      %46 = sbr.rel (0) target = $region25
    $region24: #{tpu_custom_call.1} parent=1 // pred_region
      %s48 = ssub.s32 512, 512
      %49 = vsyncadd [#allocation6], %s48
      %s50 = sshll.u32 [#allocation7], 4
      %s51 = int_to_ptr.vmem [resolvable:$true] %s50
      %56 = dma.hbm_to_vmem [thread:$0]  %s5, 512, %s51, [#allocation6], 128, 128, 8
    $region25: #{tpu_custom_call.1} parent=1 // pred_fallthru
      _
    // Predicated region
    $region26: #{tpu_custom_call.1} parent=1 // pred_check
      _
    $region27: #{tpu_custom_call.1} parent=1 // pred_check_branch
      %58 = sbr.rel (0) target = $region29
    $region28: #{tpu_custom_call.1} parent=1 // pred_region
      _
    $region29: #{tpu_custom_call.1} parent=1 // pred_fallthru
      _
    // Predicated region
    $region30: #{tpu_custom_call.1} parent=1 // pred_check
      _
    $region31: #{tpu_custom_call.1} parent=1 // pred_check_branch
      %60 = sbr.rel (0) target = $region33
    $region32: #{tpu_custom_call.1} parent=1 // pred_region
      %61 = dma.done [#allocation3], 384
    $region33: #{tpu_custom_call.1} parent=1 // pred_fallthru
      _
    // Predicated region
    $region34: #{tpu_custom_call.1} parent=1 // pred_check
      _
    $region35: #{tpu_custom_call.1} parent=1 // pred_check_branch
      %63 = sbr.rel (0) target = $region37
    $region36: #{tpu_custom_call.1} parent=1 // pred_region
      %64 = dma.done [#allocation6], 512
    $region37: #{tpu_custom_call.1} parent=1 // pred_fallthru
      _
    // Predicated region
    $region38: #{tpu_custom_call.1} parent=1 // pred_check
      _
    $region39: #{tpu_custom_call.1} parent=1 // pred_check_branch
      %66 = sbr.rel (0) target = $region41
    $region40: #{tpu_custom_call.1} parent=1 // pred_region
      %67 = dma.done [#allocation6], 512
    $region41: #{tpu_custom_call.1} parent=1 // pred_fallthru
      _
    %v68 = vld [vmem:[#allocation2] sm:$0xff]
    %v69 = vld [vmem:[#allocation2 + $0x8] sm:$0xff]
    %v70 = vld [vmem:[#allocation2 + $0x10] sm:$0xff]
    %v71 = vld [vmem:[#allocation5] sm:$0xff]
    %v72 = vld [vmem:[#allocation5 + $0x8] sm:$0xff]
    %v73 = vld [vmem:[#allocation5 + $0x10] sm:$0xff]
    %v74 = vld [vmem:[#allocation5 + $0x18] sm:$0xff]
    %v75 = vld [vmem:[%s2] sm:$0x1]
    %v77 = vlaneseq
    %v78 = vshrl.u32 %v77, 7
    %v79 = vsub.s32 0, %v78
    %v80 = vrot.slane %v75, %v79
    %vm82 = vcmask 261120
    %v84 = vsel %vm82, %v68, 0
    %v87 = vsel %vm82, %v69, 0
    %v90 = vsel %vm82, %v70, 0
    %92 = vmatprep.subr.mxu0 0.0
    %93 = vmatpush1.msra.mxu0 0.0
    %94 = vmatprep.subr.mxu0 0.0
    %95 = vmatpush1.msra.mxu0 0.0
    %96 = vmatprep.subr.mxu0 0.0
    %97 = vmatpush1.msra.mxu0 0.0
    %98 = vmatprep.subr.mxu0 0.0
    %99 = vmatpush1.msra.mxu0 0.0
    %100 = vmatprep.subr.mxu0 0.0
    %101 = vmatpush1.msra.mxu0 0.0
    %102 = vmatprep.subr.mxu0 0.0
    %103 = vmatpush1.msra.mxu0 0.0
    %104 = vmatprep.subr.mxu0 0.0
    %105 = vmatpush1.msra.mxu0 0.0
    %106 = vmatprep.subr.mxu0 0.0
    %107 = vmatpush1.msra.mxu0 0.0
    %108 = vmatprep.subr.mxu0 0.0
    %109 = vmatpush1.msra.mxu0 0.0
    %110 = vmatprep.subr.mxu0 0.0
    %111 = vmatpush1.msra.mxu0 0.0
    %112 = vmatprep.subr.mxu0 0.0
    %113 = vmatpush1.msra.mxu0 0.0
    %114 = vmatprep.subr.mxu0 0.0
    %115 = vmatpush1.msra.mxu0 0.0
    %116 = vmatprep.subr.mxu0 0.0
    %117 = vmatpush1.msra.mxu0 %v74
    %118 = vmatprep.subr.mxu0 0.0
    %119 = vmatpush1.msra.mxu0 %v73
    %120 = vmatprep.subr.mxu0 0.0
    %121 = vmatpush1.msra.mxu0 %v72
    %122 = vmatprep.subr.mxu0 0.0
    %123 = vmatpush1.msra.mxu0 %v71
    %124 = vmatprep.subr.mxu0 0.0
    %125 = vmatpush2.msra.mxu0 0.0
    %126 = vmatprep.subr.mxu0 0.0
    %127 = vmatpush2.msra.mxu0 0.0
    %128 = vmatprep.subr.mxu0 0.0
    %129 = vmatpush2.msra.mxu0 0.0
    %130 = vmatprep.subr.mxu0 0.0
    %131 = vmatpush2.msra.mxu0 0.0
    %132 = vmatprep.subr.mxu0 0.0
    %133 = vmatpush2.msra.mxu0 0.0
    %134 = vmatprep.subr.mxu0 0.0
    %135 = vmatpush2.msra.mxu0 0.0
    %136 = vmatprep.subr.mxu0 0.0
    %137 = vmatpush2.msra.mxu0 0.0
    %138 = vmatprep.subr.mxu0 0.0
    %139 = vmatpush2.msra.mxu0 0.0
    %140 = vmatprep.subr.mxu0 0.0
    %141 = vmatpush2.msra.mxu0 0.0
    %142 = vmatprep.subr.mxu0 0.0
    %143 = vmatpush2.msra.mxu0 0.0
    %144 = vmatprep.subr.mxu0 0.0
    %145 = vmatpush2.msra.mxu0 0.0
    %146 = vmatprep.subr.mxu0 0.0
    %147 = vmatpush2.msra.mxu0 0.0
    %148 = vmatprep.subr.mxu0 0.0
    %149 = vmatpush2.msra.mxu0 0.0
    %150 = vmatprep.subr.mxu0 0.0
    %151 = vmatpush2.msra.mxu0 0.0
    %152 = vmatprep.subr.mxu0 0.0
    %153 = vmatpush2.msra.mxu0 0.0
    %154 = vmatprep.subr.mxu0 0.0
    %155 = vmatpush2.msra.mxu0 0.0
    %156 = vmatprep.mubr.f32.mxu0 0.0
    %157 = vmatmul.mubr.f32.gmra.mxu0 %v84
    %v158 = vpop.f32.mrf.mxu0
    %v159 = vadd.f32 %v80, %v158
    %v160 = vpop.f32.mrf.mxu0
    %161 = vmatprep.mubr.f32.mxu0 0.0
    %162 = vmatmul.mubr.f32.gmra.mxu0 %v87
    %v163 = vpop.f32.mrf.mxu0
    %v164 = vadd.f32 %v80, %v163
    %v165 = vpop.f32.mrf.mxu0
    %166 = vmatprep.mubr.f32.mxu0 0.0
    %167 = vmatmul.mubr.f32.gmra.mxu0 %v90
    %v168 = vpop.f32.mrf.mxu0
    %v169 = vadd.f32 %v80, %v168
    %v170 = vpop.f32.mrf.mxu0
    %171 = vdwg.mxu0
    %v172 = vsel %vm82, %v159, 0.0
    %173 = vadd.xlane.f32.xlu0 %v172
    %v174 = vpop.xlane.xlu0 %173
    %v175 = vsel %vm82, %v164, 0.0
    %176 = vadd.xlane.f32.xlu0 %v175
    %v177 = vpop.xlane.xlu0 %176
    %v178 = vsel %vm82, %v169, 0.0
    %179 = vadd.xlane.f32.xlu0 %v178
    %v180 = vpop.xlane.xlu0 %179
    %v181 = vmul.f32 %v174, 0.03125
    %v182 = vmul.f32 %v177, 0.03125
    %v183 = vmul.f32 %v180, 0.03125
    %v184 = vmul.f32 %v159, %v159
    %v185 = vmul.f32 %v164, %v164
    %v186 = vmul.f32 %v169, %v169
    %v187 = vsel %vm82, %v184, 0.0
    %188 = vadd.xlane.f32.xlu0 %v187
    %v189 = vpop.xlane.xlu0 %188
    %v190 = vsel %vm82, %v185, 0.0
    %191 = vadd.xlane.f32.xlu0 %v190
    %v192 = vpop.xlane.xlu0 %191
    %v193 = vsel %vm82, %v186, 0.0
    %194 = vadd.xlane.f32.xlu0 %v193
    %v195 = vpop.xlane.xlu0 %194
    %v196 = vmul.f32 %v189, 0.03125
    %v197 = vmul.f32 %v192, 0.03125
    %v198 = vmul.f32 %v195, 0.03125
    %v199 = vmul.f32 %v181, %v181
    %v200 = vmul.f32 %v182, %v182
    %v201 = vmul.f32 %v183, %v183
    %v202 = vsub.f32 %v196, %v199
    %v203 = vsub.f32 %v197, %v200
    %v204 = vsub.f32 %v198, %v201
    %v205 = vmax.f32 %v202, 0.0
    %v206 = vmax.f32 %v203, 0.0
    %v207 = vmax.f32 %v204, 0.0
    %v208 = vsub.f32 %v159, %v181
    %v209 = vsub.f32 %v164, %v182
    %v210 = vsub.f32 %v169, %v183
    %v211 = vadd.f32 %v205, 1e-05
    %v212 = vadd.f32 %v206, 1e-05
    %v213 = vadd.f32 %v207, 1e-05
    %v214 = vrsqrt.pop %v211
    %v215 = vrsqrt.pop %v212
    %v216 = vrsqrt.pop %v213
    %v217 = vmul.f32 %v208, %v214
    %v218 = vmul.f32 %v209, %v215
    %v219 = vmul.f32 %v210, %v216
    %v220 = vld [vmem:[%s3] sm:$0x1]
    %v222 = vlaneseq
    %v223 = vshrl.u32 %v222, 7
    %v224 = vsub.s32 0, %v223
    %v225 = vrot.slane %v220, %v224
    %v227 = vmul.f32 %v217, %v225
    %v228 = vmul.f32 %v218, %v225
    %v229 = vmul.f32 %v219, %v225
    %v230 = vld [vmem:[%s4] sm:$0x1]
    %v232 = vlaneseq
    %v233 = vshrl.u32 %v232, 7
    %v234 = vsub.s32 0, %v233
    %v235 = vrot.slane %v230, %v234
    %v237 = vadd.f32 %v227, %v235
    %v238 = vadd.f32 %v228, %v235
    %v239 = vadd.f32 %v229, %v235
    %v240 = vmax.f32 %v237, 0.0
    %v241 = vmax.f32 %v238, 0.0
    %v242 = vmax.f32 %v239, 0.0
    %v243 = vld [vmem:[#allocation7] sm:$0xff]
    %v244 = vld [vmem:[#allocation7 + $0x8] sm:$0xff]
    %v245 = vld [vmem:[#allocation7 + $0x10] sm:$0xff]
    %v246 = vld [vmem:[#allocation7 + $0x18] sm:$0xff]
    %v247 = vld [vmem:[%s6] sm:$0x1]
    %v249 = vlaneseq
    %v250 = vshrl.u32 %v249, 7
    %v251 = vsub.s32 0, %v250
    %v252 = vrot.slane %v247, %v251
    %v255 = vsel %vm82, %v240, 0
    %v258 = vsel %vm82, %v241, 0
    %v261 = vsel %vm82, %v242, 0
    %263 = vmatprep.subr.mxu0 0.0
    %264 = vmatpush1.msra.mxu0 0.0
    %265 = vmatprep.subr.mxu0 0.0
    %266 = vmatpush1.msra.mxu0 0.0
    %267 = vmatprep.subr.mxu0 0.0
    %268 = vmatpush1.msra.mxu0 0.0
    %269 = vmatprep.subr.mxu0 0.0
    %270 = vmatpush1.msra.mxu0 0.0
    %271 = vmatprep.subr.mxu0 0.0
    %272 = vmatpush1.msra.mxu0 0.0
    %273 = vmatprep.subr.mxu0 0.0
    %274 = vmatpush1.msra.mxu0 0.0
    %275 = vmatprep.subr.mxu0 0.0
    %276 = vmatpush1.msra.mxu0 0.0
    %277 = vmatprep.subr.mxu0 0.0
    %278 = vmatpush1.msra.mxu0 0.0
    %279 = vmatprep.subr.mxu0 0.0
    %280 = vmatpush1.msra.mxu0 0.0
    %281 = vmatprep.subr.mxu0 0.0
    %282 = vmatpush1.msra.mxu0 0.0
    %283 = vmatprep.subr.mxu0 0.0
    %284 = vmatpush1.msra.mxu0 0.0
    %285 = vmatprep.subr.mxu0 0.0
    %286 = vmatpush1.msra.mxu0 0.0
    %287 = vmatprep.subr.mxu0 0.0
    %288 = vmatpush1.msra.mxu0 %v246
    %289 = vmatprep.subr.mxu0 0.0
    %290 = vmatpush1.msra.mxu0 %v245
    %291 = vmatprep.subr.mxu0 0.0
    %292 = vmatpush1.msra.mxu0 %v244
    %293 = vmatprep.subr.mxu0 0.0
    %294 = vmatpush1.msra.mxu0 %v243
    %295 = vmatprep.subr.mxu0 0.0
    %296 = vmatpush2.msra.mxu0 0.0
    %297 = vmatprep.subr.mxu0 0.0
    %298 = vmatpush2.msra.mxu0 0.0
    %299 = vmatprep.subr.mxu0 0.0
    %300 = vmatpush2.msra.mxu0 0.0
    %301 = vmatprep.subr.mxu0 0.0
    %302 = vmatpush2.msra.mxu0 0.0
    %303 = vmatprep.subr.mxu0 0.0
    %304 = vmatpush2.msra.mxu0 0.0
    %305 = vmatprep.subr.mxu0 0.0
    %306 = vmatpush2.msra.mxu0 0.0
    %307 = vmatprep.subr.mxu0 0.0
    %308 = vmatpush2.msra.mxu0 0.0
    %309 = vmatprep.subr.mxu0 0.0
    %310 = vmatpush2.msra.mxu0 0.0
    %311 = vmatprep.subr.mxu0 0.0
    %312 = vmatpush2.msra.mxu0 0.0
    %313 = vmatprep.subr.mxu0 0.0
    %314 = vmatpush2.msra.mxu0 0.0
    %315 = vmatprep.subr.mxu0 0.0
    %316 = vmatpush2.msra.mxu0 0.0
    %317 = vmatprep.subr.mxu0 0.0
    %318 = vmatpush2.msra.mxu0 0.0
    %319 = vmatprep.subr.mxu0 0.0
    %320 = vmatpush2.msra.mxu0 0.0
    %321 = vmatprep.subr.mxu0 0.0
    %322 = vmatpush2.msra.mxu0 0.0
    %323 = vmatprep.subr.mxu0 0.0
    %324 = vmatpush2.msra.mxu0 0.0
    %325 = vmatprep.subr.mxu0 0.0
    %326 = vmatpush2.msra.mxu0 0.0
    %327 = vmatprep.mubr.f32.mxu0 0.0
    %328 = vmatmul.mubr.f32.gmra.mxu0 %v255
    %v329 = vpop.f32.mrf.mxu0
    %v330 = vadd.f32 %v252, %v329
    %v331 = vpop.f32.mrf.mxu0
    %332 = vmatprep.mubr.f32.mxu0 0.0
    %333 = vmatmul.mubr.f32.gmra.mxu0 %v258
    %v334 = vpop.f32.mrf.mxu0
    %v335 = vadd.f32 %v252, %v334
    %v336 = vpop.f32.mrf.mxu0
    %337 = vmatprep.mubr.f32.mxu0 0.0
    %338 = vmatmul.mubr.f32.gmra.mxu0 %v261
    %v339 = vpop.f32.mrf.mxu0
    %v340 = vadd.f32 %v252, %v339
    %v341 = vpop.f32.mrf.mxu0
    %342 = vdwg.mxu0
    %343 = vst [vmem:[#allocation8] sm:$0xff] %v330
    %344 = vst [vmem:[#allocation8 + $0x8] sm:$0xff] %v335
    %345 = vst [vmem:[#allocation8 + $0x10] sm:$0xff] %v340
    // Predicated region
    $region42: #{tpu_custom_call.1} parent=1 // pred_check
      _
    $region43: #{tpu_custom_call.1} parent=1 // pred_check_branch
      %347 = sbr.rel (0) target = $region45
    $region44: #{tpu_custom_call.1} parent=1 // pred_region
      %s349 = ssub.s32 384, 384
      %350 = vsyncadd [#allocation4], %s349
      %s351 = sshll.u32 [#allocation8], 4
      %s352 = int_to_ptr.vmem [resolvable:$true] %s351
      %357 = dma.vmem_to_hbm [thread:$0]  %s352, 384, %s7, [#allocation4], 128, 128, 8
    $region45: #{tpu_custom_call.1} parent=1 // pred_fallthru
      _
    // Predicated region
    $region46: #{tpu_custom_call.1} parent=1 // pred_check
      _
    $region47: #{tpu_custom_call.1} parent=1 // pred_check_branch
      %359 = sbr.rel (0) target = $region49
    $region48: #{tpu_custom_call.1} parent=1 // pred_region
      %360 = dma.done [#allocation4], 384
    $region49: #{tpu_custom_call.1} parent=1 // pred_fallthru
      _
    %361 = vsyncpa [#allocation3], 1
    %362 = vsyncpa [#allocation6], 1
    %363 = vsyncpa [#allocation4], 1

// kernel: tpu_custom_call.1
$region0: #{tpu_custom_call.1}
  #allocation0 [shape = 'u32[]', space=smem, size = 0x4, offset = 0x4, fixed_abs, tag = 'smem constant byte address 0x4 - core index']
  #allocation1 [shape = 'u32[144,128]{1,0:T(1,128)}', space=vmem, size = 0x12000, scoped, tag = 'internal scratch']
  %s0 = inlined_call_operand.hbm [shape: f32[24,32], index: 0, kind: input, shape index: {}]
  %s1 = inlined_call_operand.hbm [shape: f32[32,32], index: 1, kind: input, shape index: {}]
  %s2 = inlined_call_operand.vmem [shape: f32[1,32], index: 2, kind: input, shape index: {}]
  %s3 = inlined_call_operand.vmem [shape: f32[1,32], index: 3, kind: input, shape index: {}]
  %s4 = inlined_call_operand.vmem [shape: f32[1,32], index: 4, kind: input, shape index: {}]
  %s5 = inlined_call_operand.hbm [shape: f32[32,128], index: 5, kind: input, shape index: {}]
  %s6 = inlined_call_operand.vmem [shape: f32[1,128], index: 6, kind: input, shape index: {}]
  %s7 = inlined_call_operand.hbm [shape: f32[24,128], index: 7, kind: output, shape index: {}]
  %s8 = sld [smem:[#allocation0]]
  $region50: #{tpu_custom_call.1} parent=0
    _
  %s10 = ssub.s32 1, %s8
  %s11 = scalar_select 0, %s10, %s8
  $region1: #{tpu_custom_call.1} parent=0
    #allocation2 [shape = 'u8[12288]{0}', space=vmem, size = 0x3000, scoped, tag = 'input window, operand 0, single buffered']
    #allocation3 [shape = 's32[1]{0}', space=sflag, size = 0x4, scoped, tag = 'scoped memory for tpu_custom_call.1']
    #allocation4 [shape = 's32[1]{0}', space=sflag, size = 0x4, scoped, tag = 'scoped memory for tpu_custom_call.1']
    #allocation5 [shape = 'u8[16384]{0}', space=vmem, size = 0x4000, scoped, tag = 'input window, operand 1, single buffered']
    #allocation6 [shape = 's32[1]{0}', space=sflag, size = 0x4, scoped, tag = 'scoped memory for tpu_custom_call.1']
    #allocation7 [shape = 'u8[16384]{0}', space=vmem, size = 0x4000, scoped, tag = 'input window, operand 5, single buffered']
    #allocation8 [shape = 'u8[12288]{0}', space=vmem, size = 0x3000, scoped, tag = 'output window, operand 0, single buffered']
    %12 = vsyncpa [#allocation3], 0
    %13 = vsyncpa [#allocation6], 0
    %14 = vsyncpa [#allocation4], 0
    // Predicated region
    $region2: #{tpu_custom_call.1} parent=1 // pred_check
      _
    $region3: #{tpu_custom_call.1} parent=1 // pred_check_branch
      %16 = sbr.rel (0) target = $region5
    $region4: #{tpu_custom_call.1} parent=1 // pred_region
      %s18 = ssub.s32 384, 384
      %19 = vsyncadd [#allocation3], %s18
      %s20 = sshll.u32 [#allocation2], 4
      %s21 = int_to_ptr.vmem [resolvable:$true] %s20
      %26 = dma.hbm_to_vmem [thread:$0]  %s0, 384, %s21, [#allocation3], 128, 128, 8
    $region5: #{tpu_custom_call.1} parent=1 // pred_fallthru
      _
    // Predicated region
    $region6: #{tpu_custom_call.1} parent=1 // pred_check
      _
    $region7: #{tpu_custom_call.1} parent=1 // pred_check_branch
      %28 = sbr.rel (0) target = $region9
    $region8: #{tpu_custom_call.1} parent=1 // pred_region
      %s30 = ssub.s32 512, 512
      %31 = vsyncadd [#allocation6], %s30
      %s32 = sshll.u32 [#allocation5], 4
      %s33 = int_to_ptr.vmem [resolvable:$true] %s32
      %38 = dma.hbm_to_vmem [thread:$0]  %s1, 512, %s33, [#allocation6], 128, 128, 8
    $region9: #{tpu_custom_call.1} parent=1 // pred_fallthru
      _
    // Predicated region
    $region10: #{tpu_custom_call.1} parent=1 // pred_check
      _
    $region11: #{tpu_custom_call.1} parent=1 // pred_check_branch
      %40 = sbr.rel (0) target = $region13
    $region12: #{tpu_custom_call.1} parent=1 // pred_region
      _
    $region13: #{tpu_custom_call.1} parent=1 // pred_fallthru
      _
    // Predicated region
    $region14: #{tpu_custom_call.1} parent=1 // pred_check
      _
    $region15: #{tpu_custom_call.1} parent=1 // pred_check_branch
      %42 = sbr.rel (0) target = $region17
    $region16: #{tpu_custom_call.1} parent=1 // pred_region
      _
    $region17: #{tpu_custom_call.1} parent=1 // pred_fallthru
      _
    // Predicated region
    $region18: #{tpu_custom_call.1} parent=1 // pred_check
      _
    $region19: #{tpu_custom_call.1} parent=1 // pred_check_branch
      %44 = sbr.rel (0) target = $region21
    $region20: #{tpu_custom_call.1} parent=1 // pred_region
      _
    $region21: #{tpu_custom_call.1} parent=1 // pred_fallthru
      _
    // Predicated region
    $region22: #{tpu_custom_call.1} parent=1 // pred_check
      _
    $region23: #{tpu_custom_call.1} parent=1 // pred_check_branch
      %46 = sbr.rel (0) target = $region25
    $region24: #{tpu_custom_call.1} parent=1 // pred_region
      %s48 = ssub.s32 512, 512
      %49 = vsyncadd [#allocation6], %s48
      %s50 = sshll.u32 [#allocation7], 4
      %s51 = int_to_ptr.vmem [resolvable:$true] %s50
      %56 = dma.hbm_to_vmem [thread:$0]  %s5, 512, %s51, [#allocation6], 128, 128, 8
    $region25: #{tpu_custom_call.1} parent=1 // pred_fallthru
      _
    // Predicated region
    $region26: #{tpu_custom_call.1} parent=1 // pred_check
      _
    $region27: #{tpu_custom_call.1} parent=1 // pred_check_branch
      %58 = sbr.rel (0) target = $region29
    $region28: #{tpu_custom_call.1} parent=1 // pred_region
      _
    $region29: #{tpu_custom_call.1} parent=1 // pred_fallthru
      _
    // Predicated region
    $region30: #{tpu_custom_call.1} parent=1 // pred_check
      _
    $region31: #{tpu_custom_call.1} parent=1 // pred_check_branch
      %60 = sbr.rel (0) target = $region33
    $region32: #{tpu_custom_call.1} parent=1 // pred_region
      %61 = dma.done [#allocation3], 384
    $region33: #{tpu_custom_call.1} parent=1 // pred_fallthru
      _
    // Predicated region
    $region34: #{tpu_custom_call.1} parent=1 // pred_check
      _
    $region35: #{tpu_custom_call.1} parent=1 // pred_check_branch
      %63 = sbr.rel (0) target = $region37
    $region36: #{tpu_custom_call.1} parent=1 // pred_region
      %64 = dma.done [#allocation6], 512
    $region37: #{tpu_custom_call.1} parent=1 // pred_fallthru
      _
    // Predicated region
    $region38: #{tpu_custom_call.1} parent=1 // pred_check
      _
    $region39: #{tpu_custom_call.1} parent=1 // pred_check_branch
      %66 = sbr.rel (0) target = $region41
    $region40: #{tpu_custom_call.1} parent=1 // pred_region
      %67 = dma.done [#allocation6], 512
    $region41: #{tpu_custom_call.1} parent=1 // pred_fallthru
      _
    %v68 = vld [vmem:[#allocation2] sm:$0xff]
    %v69 = vld [vmem:[#allocation2 + $0x8] sm:$0xff]
    %v70 = vld [vmem:[#allocation2 + $0x10] sm:$0xff]
    %v71 = vld [vmem:[#allocation5] sm:$0xff]
    %v72 = vld [vmem:[#allocation5 + $0x8] sm:$0xff]
    %v73 = vld [vmem:[#allocation5 + $0x10] sm:$0xff]
    %v74 = vld [vmem:[#allocation5 + $0x18] sm:$0xff]
    %v75 = vld [vmem:[%s2] sm:$0x1]
    %v77 = vlaneseq
    %v78 = vshrl.u32 %v77, 7
    %v79 = vsub.s32 0, %v78
    %v80 = vrot.slane %v75, %v79
    %vm82 = vcmask 261120
    %v84 = vsel %vm82, %v68, 0
    %v87 = vsel %vm82, %v69, 0
    %v90 = vsel %vm82, %v70, 0
    %92 = vmatprep.subr.mxu0 0.0
    %93 = vmatpush1.msra.mxu0 0.0
    %94 = vmatprep.subr.mxu0 0.0
    %95 = vmatpush1.msra.mxu0 0.0
    %96 = vmatprep.subr.mxu0 0.0
    %97 = vmatpush1.msra.mxu0 0.0
    %98 = vmatprep.subr.mxu0 0.0
    %99 = vmatpush1.msra.mxu0 0.0
    %100 = vmatprep.subr.mxu0 0.0
    %101 = vmatpush1.msra.mxu0 0.0
    %102 = vmatprep.subr.mxu0 0.0
    %103 = vmatpush1.msra.mxu0 0.0
    %104 = vmatprep.subr.mxu0 0.0
    %105 = vmatpush1.msra.mxu0 0.0
    %106 = vmatprep.subr.mxu0 0.0
    %107 = vmatpush1.msra.mxu0 0.0
    %108 = vmatprep.subr.mxu0 0.0
    %109 = vmatpush1.msra.mxu0 0.0
    %110 = vmatprep.subr.mxu0 0.0
    %111 = vmatpush1.msra.mxu0 0.0
    %112 = vmatprep.subr.mxu0 0.0
    %113 = vmatpush1.msra.mxu0 0.0
    %114 = vmatprep.subr.mxu0 0.0
    %115 = vmatpush1.msra.mxu0 0.0
    %116 = vmatprep.subr.mxu0 0.0
    %117 = vmatpush1.msra.mxu0 %v74
    %118 = vmatprep.subr.mxu0 0.0
    %119 = vmatpush1.msra.mxu0 %v73
    %120 = vmatprep.subr.mxu0 0.0
    %121 = vmatpush1.msra.mxu0 %v72
    %122 = vmatprep.subr.mxu0 0.0
    %123 = vmatpush1.msra.mxu0 %v71
    %124 = vmatprep.subr.mxu0 0.0
    %125 = vmatpush2.msra.mxu0 0.0
    %126 = vmatprep.subr.mxu0 0.0
    %127 = vmatpush2.msra.mxu0 0.0
    %128 = vmatprep.subr.mxu0 0.0
    %129 = vmatpush2.msra.mxu0 0.0
    %130 = vmatprep.subr.mxu0 0.0
    %131 = vmatpush2.msra.mxu0 0.0
    %132 = vmatprep.subr.mxu0 0.0
    %133 = vmatpush2.msra.mxu0 0.0
    %134 = vmatprep.subr.mxu0 0.0
    %135 = vmatpush2.msra.mxu0 0.0
    %136 = vmatprep.subr.mxu0 0.0
    %137 = vmatpush2.msra.mxu0 0.0
    %138 = vmatprep.subr.mxu0 0.0
    %139 = vmatpush2.msra.mxu0 0.0
    %140 = vmatprep.subr.mxu0 0.0
    %141 = vmatpush2.msra.mxu0 0.0
    %142 = vmatprep.subr.mxu0 0.0
    %143 = vmatpush2.msra.mxu0 0.0
    %144 = vmatprep.subr.mxu0 0.0
    %145 = vmatpush2.msra.mxu0 0.0
    %146 = vmatprep.subr.mxu0 0.0
    %147 = vmatpush2.msra.mxu0 0.0
    %148 = vmatprep.subr.mxu0 0.0
    %149 = vmatpush2.msra.mxu0 0.0
    %150 = vmatprep.subr.mxu0 0.0
    %151 = vmatpush2.msra.mxu0 0.0
    %152 = vmatprep.subr.mxu0 0.0
    %153 = vmatpush2.msra.mxu0 0.0
    %154 = vmatprep.subr.mxu0 0.0
    %155 = vmatpush2.msra.mxu0 0.0
    %156 = vmatprep.mubr.f32.mxu0 0.0
    %157 = vmatmul.mubr.f32.gmra.mxu0 %v84
    %v158 = vpop.f32.mrf.mxu0
    %v159 = vadd.f32 %v80, %v158
    %v160 = vpop.f32.mrf.mxu0
    %161 = vmatprep.mubr.f32.mxu0 0.0
    %162 = vmatmul.mubr.f32.gmra.mxu0 %v87
    %v163 = vpop.f32.mrf.mxu0
    %v164 = vadd.f32 %v80, %v163
    %v165 = vpop.f32.mrf.mxu0
    %166 = vmatprep.mubr.f32.mxu0 0.0
    %167 = vmatmul.mubr.f32.gmra.mxu0 %v90
    %v168 = vpop.f32.mrf.mxu0
    %v169 = vadd.f32 %v80, %v168
    %v170 = vpop.f32.mrf.mxu0
    %171 = vdwg.mxu0
    %v172 = vsel %vm82, %v159, 0.0
    %173 = vadd.xlane.f32.xlu0 %v172
    %v174 = vpop.xlane.xlu0 %173
    %v175 = vsel %vm82, %v164, 0.0
    %176 = vadd.xlane.f32.xlu0 %v175
    %v177 = vpop.xlane.xlu0 %176
    %v178 = vsel %vm82, %v169, 0.0
    %179 = vadd.xlane.f32.xlu0 %v178
    %v180 = vpop.xlane.xlu0 %179
    %v181 = vmul.f32 %v174, 0.03125
    %v182 = vmul.f32 %v177, 0.03125
    %v183 = vmul.f32 %v180, 0.03125
    %v184 = vmul.f32 %v159, %v159
    %v185 = vmul.f32 %v164, %v164
    %v186 = vmul.f32 %v169, %v169
    %v187 = vsel %vm82, %v184, 0.0
    %188 = vadd.xlane.f32.xlu0 %v187
    %v189 = vpop.xlane.xlu0 %188
    %v190 = vsel %vm82, %v185, 0.0
    %191 = vadd.xlane.f32.xlu0 %v190
    %v192 = vpop.xlane.xlu0 %191
    %v193 = vsel %vm82, %v186, 0.0
    %194 = vadd.xlane.f32.xlu0 %v193
    %v195 = vpop.xlane.xlu0 %194
    %v196 = vmul.f32 %v189, 0.03125
    %v197 = vmul.f32 %v192, 0.03125
    %v198 = vmul.f32 %v195, 0.03125
    %v199 = vmul.f32 %v181, %v181
    %v200 = vmul.f32 %v182, %v182
    %v201 = vmul.f32 %v183, %v183
    %v202 = vsub.f32 %v196, %v199
    %v203 = vsub.f32 %v197, %v200
    %v204 = vsub.f32 %v198, %v201
    %v205 = vmax.f32 %v202, 0.0
    %v206 = vmax.f32 %v203, 0.0
    %v207 = vmax.f32 %v204, 0.0
    %v208 = vsub.f32 %v159, %v181
    %v209 = vsub.f32 %v164, %v182
    %v210 = vsub.f32 %v169, %v183
    %v211 = vadd.f32 %v205, 1e-05
    %v212 = vadd.f32 %v206, 1e-05
    %v213 = vadd.f32 %v207, 1e-05
    %v214 = vrsqrt.pop %v211
    %v215 = vrsqrt.pop %v212
    %v216 = vrsqrt.pop %v213
    %v217 = vmul.f32 %v208, %v214
    %v218 = vmul.f32 %v209, %v215
    %v219 = vmul.f32 %v210, %v216
    %v220 = vld [vmem:[%s3] sm:$0x1]
    %v222 = vlaneseq
    %v223 = vshrl.u32 %v222, 7
    %v224 = vsub.s32 0, %v223
    %v225 = vrot.slane %v220, %v224
    %v227 = vmul.f32 %v217, %v225
    %v228 = vmul.f32 %v218, %v225
    %v229 = vmul.f32 %v219, %v225
    %v230 = vld [vmem:[%s4] sm:$0x1]
    %v232 = vlaneseq
    %v233 = vshrl.u32 %v232, 7
    %v234 = vsub.s32 0, %v233
    %v235 = vrot.slane %v230, %v234
    %v237 = vadd.f32 %v227, %v235
    %v238 = vadd.f32 %v228, %v235
    %v239 = vadd.f32 %v229, %v235
    %v240 = vmax.f32 %v237, 0.0
    %v241 = vmax.f32 %v238, 0.0
    %v242 = vmax.f32 %v239, 0.0
    %v243 = vld [vmem:[#allocation7] sm:$0xff]
    %v244 = vld [vmem:[#allocation7 + $0x8] sm:$0xff]
    %v245 = vld [vmem:[#allocation7 + $0x10] sm:$0xff]
    %v246 = vld [vmem:[#allocation7 + $0x18] sm:$0xff]
    %v247 = vld [vmem:[%s6] sm:$0x1]
    %v249 = vlaneseq
    %v250 = vshrl.u32 %v249, 7
    %v251 = vsub.s32 0, %v250
    %v252 = vrot.slane %v247, %v251
    %v255 = vsel %vm82, %v240, 0
    %v258 = vsel %vm82, %v241, 0
    %v261 = vsel %vm82, %v242, 0
    %263 = vmatprep.subr.mxu0 0.0
    %264 = vmatpush1.msra.mxu0 0.0
    %265 = vmatprep.subr.mxu0 0.0
    %266 = vmatpush1.msra.mxu0 0.0
    %267 = vmatprep.subr.mxu0 0.0
    %268 = vmatpush1.msra.mxu0 0.0
    %269 = vmatprep.subr.mxu0 0.0
    %270 = vmatpush1.msra.mxu0 0.0
    %271 = vmatprep.subr.mxu0 0.0
    %272 = vmatpush1.msra.mxu0 0.0
    %273 = vmatprep.subr.mxu0 0.0
    %274 = vmatpush1.msra.mxu0 0.0
    %275 = vmatprep.subr.mxu0 0.0
    %276 = vmatpush1.msra.mxu0 0.0
    %277 = vmatprep.subr.mxu0 0.0
    %278 = vmatpush1.msra.mxu0 0.0
    %279 = vmatprep.subr.mxu0 0.0
    %280 = vmatpush1.msra.mxu0 0.0
    %281 = vmatprep.subr.mxu0 0.0
    %282 = vmatpush1.msra.mxu0 0.0
    %283 = vmatprep.subr.mxu0 0.0
    %284 = vmatpush1.msra.mxu0 0.0
    %285 = vmatprep.subr.mxu0 0.0
    %286 = vmatpush1.msra.mxu0 0.0
    %287 = vmatprep.subr.mxu0 0.0
    %288 = vmatpush1.msra.mxu0 %v246
    %289 = vmatprep.subr.mxu0 0.0
    %290 = vmatpush1.msra.mxu0 %v245
    %291 = vmatprep.subr.mxu0 0.0
    %292 = vmatpush1.msra.mxu0 %v244
    %293 = vmatprep.subr.mxu0 0.0
    %294 = vmatpush1.msra.mxu0 %v243
    %295 = vmatprep.subr.mxu0 0.0
    %296 = vmatpush2.msra.mxu0 0.0
    %297 = vmatprep.subr.mxu0 0.0
    %298 = vmatpush2.msra.mxu0 0.0
    %299 = vmatprep.subr.mxu0 0.0
    %300 = vmatpush2.msra.mxu0 0.0
    %301 = vmatprep.subr.mxu0 0.0
    %302 = vmatpush2.msra.mxu0 0.0
    %303 = vmatprep.subr.mxu0 0.0
    %304 = vmatpush2.msra.mxu0 0.0
    %305 = vmatprep.subr.mxu0 0.0
    %306 = vmatpush2.msra.mxu0 0.0
    %307 = vmatprep.subr.mxu0 0.0
    %308 = vmatpush2.msra.mxu0 0.0
    %309 = vmatprep.subr.mxu0 0.0
    %310 = vmatpush2.msra.mxu0 0.0
    %311 = vmatprep.subr.mxu0 0.0
    %312 = vmatpush2.msra.mxu0 0.0
    %313 = vmatprep.subr.mxu0 0.0
    %314 = vmatpush2.msra.mxu0 0.0
    %315 = vmatprep.subr.mxu0 0.0
    %316 = vmatpush2.msra.mxu0 0.0
    %317 = vmatprep.subr.mxu0 0.0
    %318 = vmatpush2.msra.mxu0 0.0
    %319 = vmatprep.subr.mxu0 0.0
    %320 = vmatpush2.msra.mxu0 0.0
    %321 = vmatprep.subr.mxu0 0.0
    %322 = vmatpush2.msra.mxu0 0.0
    %323 = vmatprep.subr.mxu0 0.0
    %324 = vmatpush2.msra.mxu0 0.0
    %325 = vmatprep.subr.mxu0 0.0
    %326 = vmatpush2.msra.mxu0 0.0
    %327 = vmatprep.mubr.f32.mxu0 0.0
    %328 = vmatmul.mubr.f32.gmra.mxu0 %v255
    %v329 = vpop.f32.mrf.mxu0
    %v330 = vadd.f32 %v252, %v329
    %v331 = vpop.f32.mrf.mxu0
    %332 = vmatprep.mubr.f32.mxu0 0.0
    %333 = vmatmul.mubr.f32.gmra.mxu0 %v258
    %v334 = vpop.f32.mrf.mxu0
    %v335 = vadd.f32 %v252, %v334
    %v336 = vpop.f32.mrf.mxu0
    %337 = vmatprep.mubr.f32.mxu0 0.0
    %338 = vmatmul.mubr.f32.gmra.mxu0 %v261
    %v339 = vpop.f32.mrf.mxu0
    %v340 = vadd.f32 %v252, %v339
    %v341 = vpop.f32.mrf.mxu0
    %342 = vdwg.mxu0
    %343 = vst [vmem:[#allocation8] sm:$0xff] %v330
    %344 = vst [vmem:[#allocation8 + $0x8] sm:$0xff] %v335
    %345 = vst [vmem:[#allocation8 + $0x10] sm:$0xff] %v340
    // Predicated region
    $region42: #{tpu_custom_call.1} parent=1 // pred_check
      _
    $region43: #{tpu_custom_call.1} parent=1 // pred_check_branch
      %347 = sbr.rel (0) target = $region45
    $region44: #{tpu_custom_call.1} parent=1 // pred_region
      %s349 = ssub.s32 384, 384
      %350 = vsyncadd [#allocation4], %s349
      %s351 = sshll.u32 [#allocation8], 4
      %s352 = int_to_ptr.vmem [resolvable:$true] %s351
      %357 = dma.vmem_to_hbm [thread:$0]  %s352, 384, %s7, [#allocation4], 128, 128, 8
    $region45: #{tpu_custom_call.1} parent=1 // pred_fallthru
      _
    // Predicated region
    $region46: #{tpu_custom_call.1} parent=1 // pred_check
      _
    $region47: #{tpu_custom_call.1} parent=1 // pred_check_branch
      %359 = sbr.rel (0) target = $region49
    $region48: #{tpu_custom_call.1} parent=1 // pred_region
      %360 = dma.done [#allocation4], 384
    $region49: #{tpu_custom_call.1} parent=1 // pred_fallthru
      _
    %361 = vsyncpa [#allocation3], 1
    %362 = vsyncpa [#allocation6], 1
    %363 = vsyncpa [#allocation4], 1

</llo_original>
